<compile_context>
chip_gen: v6e
topology: v6e:2x2x1
jax: 0.10.0
libtpu: 0.0.40
codegen_flags: <defaults>
</compile_context>

<pallas_src>
import functools

import jax
import jax.numpy as jnp
from jax.experimental import pallas as pl
from jax.experimental.pallas import tpu as pltpu


def _round_up(x, m):
    return ((x + m - 1) // m) * m


def mlp_kernel(x_ref, w1_ref, b1_ref, w2_ref, b2_ref, w3_ref, b3_ref, o_ref):
    # linear1: bf16 x bf16 -> f32 accumulate, bias + ReLU in f32.
    h1 = jnp.dot(x_ref[...], w1_ref[...], preferred_element_type=jnp.float32)
    h1 = jnp.maximum(h1 + b1_ref[...], 0.0)
    # linear2: cast activation back to bf16 for the MXU, accumulate in f32.
    h2 = jnp.dot(h1.astype(w2_ref.dtype), w2_ref[...],
                 preferred_element_type=jnp.float32) + b2_ref[...]
    # linear3: output columns are zero-padded to a lane-dense (x128) width.
    out = jnp.dot(h2.astype(w3_ref.dtype), w3_ref[...],
                  preferred_element_type=jnp.float32) + b3_ref[...]
    o_ref[...] = out.astype(o_ref.dtype)


@functools.partial(jax.jit, static_argnames=("block_b",))
def mlp_forward(x, w1, b1, w2, b2, w3, b3, *, block_b=512):
    B, in_size = x.shape
    h1_size = w1.shape[1]
    h2_size = w2.shape[1]
    out_size = w3.shape[1]

    # ---- lane-dense output padding (e.g. 16 -> 128) --------------------------
    out_pad = _round_up(out_size, 128)
    if out_pad != out_size:
        w3 = jnp.pad(w3, ((0, 0), (0, out_pad - out_size)))
        b3 = jnp.pad(b3, ((0, out_pad - out_size),))

    # ---- bf16 operands, f32 accumulation inside the kernel -------------------
    x_bf = x.astype(jnp.bfloat16)
    w1_bf = w1.astype(jnp.bfloat16)
    w2_bf = w2.astype(jnp.bfloat16)
    w3_bf = w3.astype(jnp.bfloat16)

    # Biases stay f32 (added to f32 accumulators), shaped (1, H) so they
    # broadcast over the batch and keep a 2-D TPU layout.
    b1_2d = b1.astype(jnp.float32).reshape(1, -1)
    b2_2d = b2.astype(jnp.float32).reshape(1, -1)
    b3_2d = b3.astype(jnp.float32).reshape(1, -1)

    # ---- batch tiling ---------------------------------------------------------
    tb = block_b if B >= block_b else _round_up(B, 8)
    b_pad = _round_up(B, tb)
    if b_pad != B:
        x_bf = jnp.pad(x_bf, ((0, b_pad - B), (0, 0)))
    grid = (b_pad // tb,)

    # Weights/biases: whole-array block, constant index => resident across steps.
    full2d = lambda arr: pl.BlockSpec(arr.shape, lambda i: (0, 0))

    flops = 2 * b_pad * (in_size * h1_size + h1_size * h2_size + h2_size * out_pad)
    bytes_accessed = (
        x_bf.size * 2
        + (w1_bf.size + w2_bf.size + w3_bf.size) * 2
        + (b1_2d.size + b2_2d.size + b3_2d.size) * 4
        + b_pad * out_pad * 4
    )

    y_pad = pl.pallas_call(
        mlp_kernel,
        out_shape=jax.ShapeDtypeStruct((b_pad, out_pad), jnp.float32),
        grid=grid,
        in_specs=[
            pl.BlockSpec((tb, in_size), lambda i: (i, 0)),  # x tile (batch-sliced)
            full2d(w1_bf), full2d(b1_2d),
            full2d(w2_bf), full2d(b2_2d),
            full2d(w3_bf), full2d(b3_2d),
        ],
        out_specs=pl.BlockSpec((tb, out_pad), lambda i: (i, 0)),
        compiler_params=pltpu.CompilerParams(
            dimension_semantics=("parallel",),
        ),
        cost_estimate=pl.CostEstimate(
            flops=flops, transcendentals=0, bytes_accessed=bytes_accessed),
    )(x_bf, w1_bf, b1_2d, w2_bf, b2_2d, w3_bf, b3_2d)

    # Slice padded batch rows / padded output columns back off.
    return y_pad[:B, :out_size]


def init_linear(key, in_features, out_features, dtype=jnp.float32):
    """Deterministic init mimicking nn.Linear: U(-1/sqrt(fan_in), +1/sqrt(fan_in)).
    Weight stored as (in_features, out_features) for x @ W."""
    kw, kb = jax.random.split(key)
    bound = 1.0 / (in_features ** 0.5)
    w = jax.random.uniform(kw, (in_features, out_features), dtype,
                           minval=-bound, maxval=bound)
    b = jax.random.uniform(kb, (out_features,), dtype,
                           minval=-bound, maxval=bound)
    return w, b


if __name__ == "__main__":
    # Small shapes consistent with the module:
    # input_size=32, hidden1_size=64, hidden2_size=64, output_size=16, batch=8
    input_size, hidden1_size, hidden2_size, output_size = 32, 64, 64, 16
    batch = 8

    key = jax.random.PRNGKey(0)
    kx, k1, k2, k3 = jax.random.split(key, 4)

    x = jax.random.normal(kx, (batch, input_size), jnp.float32)
    w1, b1 = init_linear(k1, input_size, hidden1_size)
    w2, b2 = init_linear(k2, hidden1_size, hidden2_size)
    w3, b3 = init_linear(k3, hidden2_size, output_size)

    y = mlp_forward(x, w1, b1, w2, b2, w3, b3)
    jax.block_until_ready(y)

    # Full-precision reference of the same forward pass (bf16 operands in the
    # kernel => modest tolerance).
    h1_ref = jnp.maximum(x @ w1 + b1, 0.0)
    h2_ref = h1_ref @ w2 + b2
    y_ref = h2_ref @ w3 + b3
    assert y.shape == (batch, output_size)
    assert jnp.allclose(y, y_ref, atol=5e-2, rtol=5e-2), (
        float(jnp.max(jnp.abs(y - y_ref))))

    print("KERNEL_OK")
</pallas_src>

<mosaic_0001>
module attributes {stable_mosaic.version = 11 : i64} {
  func.func @mlp_kernel(%arg0: i32, %arg1: memref<8x32xbf16, #tpu.memory_space<vmem>>, %arg2: memref<32x64xbf16, #tpu.memory_space<vmem>>, %arg3: memref<1x64xf32, #tpu.memory_space<vmem>>, %arg4: memref<64x64xbf16, #tpu.memory_space<vmem>>, %arg5: memref<1x64xf32, #tpu.memory_space<vmem>>, %arg6: memref<64x128xbf16, #tpu.memory_space<vmem>>, %arg7: memref<1x128xf32, #tpu.memory_space<vmem>>, %arg8: memref<8x128xf32, #tpu.memory_space<vmem>>) attributes {dimension_semantics = [#tpu.dimension_semantics<parallel>], iteration_bounds = array<i64: 1>, scalar_prefetch = 0 : i64, scratch_operands = 0 : i64, tpu.core_type = #tpu.core_type<tc>, window_params = [{transform_indices = @transform_0, window_bounds = array<i64: 8, 32>}, {pipeline_mode = #tpu.pipeline_mode<synchronous>, transform_indices = @transform_1, window_bounds = array<i64: 32, 64>}, {pipeline_mode = #tpu.pipeline_mode<synchronous>, transform_indices = @transform_2, window_bounds = array<i64: 1, 64>}, {pipeline_mode = #tpu.pipeline_mode<synchronous>, transform_indices = @transform_3, window_bounds = array<i64: 64, 64>}, {pipeline_mode = #tpu.pipeline_mode<synchronous>, transform_indices = @transform_4, window_bounds = array<i64: 1, 64>}, {pipeline_mode = #tpu.pipeline_mode<synchronous>, transform_indices = @transform_5, window_bounds = array<i64: 64, 128>}, {pipeline_mode = #tpu.pipeline_mode<synchronous>, transform_indices = @transform_6, window_bounds = array<i64: 1, 128>}, {transform_indices = @transform_7, window_bounds = array<i64: 8, 128>}]} {
    %c0 = arith.constant 0 : index
    %c0_0 = arith.constant 0 : index
    %0 = vector.load %arg1[%c0, %c0_0] : memref<8x32xbf16, #tpu.memory_space<vmem>>, vector<8x32xbf16>
    %c0_1 = arith.constant 0 : index
    %c0_2 = arith.constant 0 : index
    %1 = vector.load %arg2[%c0_1, %c0_2] : memref<32x64xbf16, #tpu.memory_space<vmem>>, vector<32x64xbf16>
    %cst = arith.constant dense<0.000000e+00> : vector<8x64xf32>
    %2 = tpu.matmul %0, %1, %cst {dimension_numbers = #tpu.dot_dimension_numbers<[1], [0], [0], [1], [0, 0, 1, 1], [], []>} : vector<8x32xbf16>, vector<32x64xbf16>, vector<8x64xf32> -> vector<8x64xf32>
    %c0_3 = arith.constant 0 : index
    %c0_4 = arith.constant 0 : index
    %3 = vector.load %arg3[%c0_3, %c0_4] : memref<1x64xf32, #tpu.memory_space<vmem>>, vector<1x64xf32>
    %4 = vector.broadcast %3 : vector<1x64xf32> to vector<8x64xf32>
    %5 = arith.addf %2, %4 : vector<8x64xf32>
    %cst_5 = arith.constant 0.000000e+00 : f32
    %6 = vector.broadcast %cst_5 : f32 to vector<8x64xf32>
    %7 = arith.maximumf %5, %6 : vector<8x64xf32>
    %8 = arith.truncf %7 : vector<8x64xf32> to vector<8x64xbf16>
    %c0_6 = arith.constant 0 : index
    %c0_7 = arith.constant 0 : index
    %9 = vector.load %arg4[%c0_6, %c0_7] : memref<64x64xbf16, #tpu.memory_space<vmem>>, vector<64x64xbf16>
    %cst_8 = arith.constant dense<0.000000e+00> : vector<8x64xf32>
    %10 = tpu.matmul %8, %9, %cst_8 {dimension_numbers = #tpu.dot_dimension_numbers<[1], [0], [0], [1], [0, 0, 1, 1], [], []>} : vector<8x64xbf16>, vector<64x64xbf16>, vector<8x64xf32> -> vector<8x64xf32>
    %c0_9 = arith.constant 0 : index
    %c0_10 = arith.constant 0 : index
    %11 = vector.load %arg5[%c0_9, %c0_10] : memref<1x64xf32, #tpu.memory_space<vmem>>, vector<1x64xf32>
    %12 = vector.broadcast %11 : vector<1x64xf32> to vector<8x64xf32>
    %13 = arith.addf %10, %12 : vector<8x64xf32>
    %14 = arith.truncf %13 : vector<8x64xf32> to vector<8x64xbf16>
    %c0_11 = arith.constant 0 : index
    %c0_12 = arith.constant 0 : index
    %15 = vector.load %arg6[%c0_11, %c0_12] : memref<64x128xbf16, #tpu.memory_space<vmem>>, vector<64x128xbf16>
    %cst_13 = arith.constant dense<0.000000e+00> : vector<8x128xf32>
    %16 = tpu.matmul %14, %15, %cst_13 {dimension_numbers = #tpu.dot_dimension_numbers<[1], [0], [0], [1], [0, 0, 1, 1], [], []>} : vector<8x64xbf16>, vector<64x128xbf16>, vector<8x128xf32> -> vector<8x128xf32>
    %c0_14 = arith.constant 0 : index
    %c0_15 = arith.constant 0 : index
    %17 = vector.load %arg7[%c0_14, %c0_15] : memref<1x128xf32, #tpu.memory_space<vmem>>, vector<1x128xf32>
    %18 = vector.broadcast %17 : vector<1x128xf32> to vector<8x128xf32>
    %19 = arith.addf %16, %18 : vector<8x128xf32>
    %c0_16 = arith.constant 0 : index
    %c0_17 = arith.constant 0 : index
    %20 = vector.load %arg8[%c0_16, %c0_17] : memref<8x128xf32, #tpu.memory_space<vmem>>, vector<8x128xf32>
    tpu.vector_store %arg8[%c0_16, %c0_17], %19 {strides = array<i32>} : memref<8x128xf32, #tpu.memory_space<vmem>>, vector<8x128xf32>,
    return
  }
  func.func @transform_0(%arg0: i32) -> (i32, i32) {
    %c0_i32 = arith.constant 0 : i32
    %c0_i32_0 = arith.constant 0 : i32
    return %arg0, %c0_i32 : i32, i32
  }
  func.func @transform_1(%arg0: i32) -> (i32, i32) {
    %c0_i32 = arith.constant 0 : i32
    %c0_i32_0 = arith.constant 0 : i32
    %c0_i32_1 = arith.constant 0 : i32
    return %c0_i32, %c0_i32_0 : i32, i32
  }
  func.func @transform_2(%arg0: i32) -> (i32, i32) {
    %c0_i32 = arith.constant 0 : i32
    %c0_i32_0 = arith.constant 0 : i32
    %c0_i32_1 = arith.constant 0 : i32
    return %c0_i32, %c0_i32_0 : i32, i32
  }
  func.func @transform_3(%arg0: i32) -> (i32, i32) {
    %c0_i32 = arith.constant 0 : i32
    %c0_i32_0 = arith.constant 0 : i32
    %c0_i32_1 = arith.constant 0 : i32
    return %c0_i32, %c0_i32_0 : i32, i32
  }
  func.func @transform_4(%arg0: i32) -> (i32, i32) {
    %c0_i32 = arith.constant 0 : i32
    %c0_i32_0 = arith.constant 0 : i32
    %c0_i32_1 = arith.constant 0 : i32
    return %c0_i32, %c0_i32_0 : i32, i32
  }
  func.func @transform_5(%arg0: i32) -> (i32, i32) {
    %c0_i32 = arith.constant 0 : i32
    %c0_i32_0 = arith.constant 0 : i32
    %c0_i32_1 = arith.constant 0 : i32
    return %c0_i32, %c0_i32_0 : i32, i32
  }
  func.func @transform_6(%arg0: i32) -> (i32, i32) {
    %c0_i32 = arith.constant 0 : i32
    %c0_i32_0 = arith.constant 0 : i32
    %c0_i32_1 = arith.constant 0 : i32
    return %c0_i32, %c0_i32_0 : i32, i32
  }
  func.func @transform_7(%arg0: i32) -> (i32, i32) {
    %c0_i32 = arith.constant 0 : i32
    %c0_i32_0 = arith.constant 0 : i32
    return %arg0, %c0_i32 : i32, i32
  }
}

</mosaic_0001>

<llo_original>
// kernel: mlp_forward.1
$region0: #{mlp_forward.1}
  #allocation0 [shape = 'u32[]', space=smem, size = 0x4, offset = 0x4, fixed_abs, tag = 'smem constant byte address 0x4 - core index']
  #allocation1 [shape = 'u32[144,128]{1,0:T(1,128)}', space=vmem, size = 0x12000, scoped, tag = 'internal scratch']
  %s0 = inlined_call_operand.vmem [shape: bf16[8,32], index: 0, kind: input, shape index: {}]
  %s1 = inlined_call_operand.vmem [shape: bf16[32,64], index: 1, kind: input, shape index: {}]
  %s2 = inlined_call_operand.vmem [shape: f32[1,64], index: 2, kind: input, shape index: {}]
  %s3 = inlined_call_operand.vmem [shape: bf16[64,64], index: 3, kind: input, shape index: {}]
  %s4 = inlined_call_operand.vmem [shape: f32[1,64], index: 4, kind: input, shape index: {}]
  %s5 = inlined_call_operand.vmem [shape: bf16[64,128], index: 5, kind: input, shape index: {}]
  %s6 = inlined_call_operand.vmem [shape: f32[1,128], index: 6, kind: input, shape index: {}]
  %s7 = inlined_call_operand.hbm [shape: f32[8,128], index: 7, kind: output, shape index: {}]
  %s8 = sld [smem:[#allocation0]]
  $region38: #{mlp_forward.1} parent=0
    _
  %s10 = ssub.s32 1, %s8
  %s11 = scalar_select 0, %s10, %s8
  $region1: #{mlp_forward.1} parent=0
    #allocation2 [shape = 'u8[4096]{0}', space=vmem, size = 0x1000, scoped, tag = 'output window, operand 0, single buffered']
    #allocation3 [shape = 's32[1]{0}', space=sflag, size = 0x4, scoped, tag = 'scoped memory for mlp_forward.1']
    %12 = vsyncpa [#allocation3], 0
    // Predicated region
    $region2: #{mlp_forward.1} parent=1 // pred_check
      _
    $region3: #{mlp_forward.1} parent=1 // pred_check_branch
      %14 = sbr.rel (0) target = $region5
    $region4: #{mlp_forward.1} parent=1 // pred_region
      _
    $region5: #{mlp_forward.1} parent=1 // pred_fallthru
      _
    // Predicated region
    $region6: #{mlp_forward.1} parent=1 // pred_check
      _
    $region7: #{mlp_forward.1} parent=1 // pred_check_branch
      %16 = sbr.rel (0) target = $region9
    $region8: #{mlp_forward.1} parent=1 // pred_region
      _
    $region9: #{mlp_forward.1} parent=1 // pred_fallthru
      _
    // Predicated region
    $region10: #{mlp_forward.1} parent=1 // pred_check
      _
    $region11: #{mlp_forward.1} parent=1 // pred_check_branch
      %18 = sbr.rel (0) target = $region13
    $region12: #{mlp_forward.1} parent=1 // pred_region
      _
    $region13: #{mlp_forward.1} parent=1 // pred_fallthru
      _
    // Predicated region
    $region14: #{mlp_forward.1} parent=1 // pred_check
      _
    $region15: #{mlp_forward.1} parent=1 // pred_check_branch
      %20 = sbr.rel (0) target = $region17
    $region16: #{mlp_forward.1} parent=1 // pred_region
      _
    $region17: #{mlp_forward.1} parent=1 // pred_fallthru
      _
    // Predicated region
    $region18: #{mlp_forward.1} parent=1 // pred_check
      _
    $region19: #{mlp_forward.1} parent=1 // pred_check_branch
      %22 = sbr.rel (0) target = $region21
    $region20: #{mlp_forward.1} parent=1 // pred_region
      _
    $region21: #{mlp_forward.1} parent=1 // pred_fallthru
      _
    // Predicated region
    $region22: #{mlp_forward.1} parent=1 // pred_check
      _
    $region23: #{mlp_forward.1} parent=1 // pred_check_branch
      %24 = sbr.rel (0) target = $region25
    $region24: #{mlp_forward.1} parent=1 // pred_region
      _
    $region25: #{mlp_forward.1} parent=1 // pred_fallthru
      _
    // Predicated region
    $region26: #{mlp_forward.1} parent=1 // pred_check
      _
    $region27: #{mlp_forward.1} parent=1 // pred_check_branch
      %26 = sbr.rel (0) target = $region29
    $region28: #{mlp_forward.1} parent=1 // pred_region
      _
    $region29: #{mlp_forward.1} parent=1 // pred_fallthru
      _
    %v28 = vld [vmem:[%s0] sm:$0xf]
    %v29 = vld [vmem:[%s1] sm:$0xf]
    %v30 = vld [vmem:[%s1 + $0x4] sm:$0xf]
    %v31 = vld [vmem:[%s1 + $0x8] sm:$0xf]
    %v32 = vld [vmem:[%s1 + $0xc] sm:$0xf]
    %v33 = vld [vmem:[%s2] sm:$0x1]
    %v35 = vlaneseq
    %v36 = vshrl.u32 %v35, 7
    %v37 = vsub.s32 0, %v36
    %v38 = vrot.slane %v33, %v37
    %v44 = vunpack.c.l.b16 %v29
    %v45 = vunpack.c.l.b16 %v30
    %v46 = vunpack.c.l.b16 %v31
    %v47 = vunpack.c.l.b16 %v32
    %v48 = vpack.c.b16 %v45, %v44
    %v49 = vpack.c.b16 %v47, %v46
    %vm52 = vcmask 261120
    %v54 = vsel %vm52, %v28, 0
    %56 = vmatprep.subr.bf16.mxu0 0
    %57 = vmatpush1.bf16.msra.mxu0 0
    %58 = vmatprep.subr.bf16.mxu0 0
    %59 = vmatpush1.bf16.msra.mxu0 0
    %60 = vmatprep.subr.bf16.mxu0 0
    %61 = vmatpush1.bf16.msra.mxu0 0
    %62 = vmatprep.subr.bf16.mxu0 0
    %63 = vmatpush1.bf16.msra.mxu0 0
    %64 = vmatprep.subr.bf16.mxu0 0
    %65 = vmatpush1.bf16.msra.mxu0 0
    %66 = vmatprep.subr.bf16.mxu0 0
    %67 = vmatpush1.bf16.msra.mxu0 0
    %68 = vmatprep.subr.bf16.mxu0 0
    %69 = vmatpush1.bf16.msra.mxu0 %v49
    %70 = vmatprep.subr.bf16.mxu0 0
    %71 = vmatpush1.bf16.msra.mxu0 %v48
    %72 = vmatprep.subr.bf16.mxu0 0
    %73 = vmatpush2.bf16.msra.mxu0 0
    %74 = vmatprep.subr.bf16.mxu0 0
    %75 = vmatpush2.bf16.msra.mxu0 0
    %76 = vmatprep.subr.bf16.mxu0 0
    %77 = vmatpush2.bf16.msra.mxu0 0
    %78 = vmatprep.subr.bf16.mxu0 0
    %79 = vmatpush2.bf16.msra.mxu0 0
    %80 = vmatprep.subr.bf16.mxu0 0
    %81 = vmatpush2.bf16.msra.mxu0 0
    %82 = vmatprep.subr.bf16.mxu0 0
    %83 = vmatpush2.bf16.msra.mxu0 0
    %84 = vmatprep.subr.bf16.mxu0 0
    %85 = vmatpush2.bf16.msra.mxu0 0
    %86 = vmatprep.subr.bf16.mxu0 0
    %87 = vmatpush2.bf16.msra.mxu0 0
    %88 = vmatprep.mubr.bf16.mxu0 0
    %89 = vmatmul.mubr.bf16.gmra.mxu0 %v54
    %v90 = vpop.f32.mrf.mxu0
    %v91 = vadd.f32 %v38, %v90
    %v92 = vpop.f32.mrf.mxu0
    %v93 = vpop.f32.mrf.mxu0
    %v94 = vpop.f32.mrf.mxu0
    %95 = vdwg.mxu0
    %v96 = vmax.f32 %v91, 0.0
    %v97 = vpack.c.bf16 %v96, %v96
    %v98 = vld [vmem:[%s3] sm:$0xf]
    %v99 = vld [vmem:[%s3 + $0x4] sm:$0xf]
    %v100 = vld [vmem:[%s3 + $0x8] sm:$0xf]
    %v101 = vld [vmem:[%s3 + $0xc] sm:$0xf]
    %v102 = vld [vmem:[%s3 + $0x10] sm:$0xf]
    %v103 = vld [vmem:[%s3 + $0x14] sm:$0xf]
    %v104 = vld [vmem:[%s3 + $0x18] sm:$0xf]
    %v105 = vld [vmem:[%s3 + $0x1c] sm:$0xf]
    %v106 = vld [vmem:[%s4] sm:$0x1]
    %v108 = vlaneseq
    %v109 = vshrl.u32 %v108, 7
    %v110 = vsub.s32 0, %v109
    %v111 = vrot.slane %v106, %v110
    %v121 = vunpack.c.l.b16 %v98
    %v122 = vunpack.c.l.b16 %v99
    %v123 = vunpack.c.l.b16 %v100
    %v124 = vunpack.c.l.b16 %v101
    %v125 = vunpack.c.l.b16 %v102
    %v126 = vunpack.c.l.b16 %v103
    %v127 = vunpack.c.l.b16 %v104
    %v128 = vunpack.c.l.b16 %v105
    %v129 = vpack.c.b16 %v122, %v121
    %v130 = vpack.c.b16 %v124, %v123
    %v131 = vpack.c.b16 %v126, %v125
    %v132 = vpack.c.b16 %v128, %v127
    %vm137 = vcmask 523264
    %v139 = vsel %vm137, %v97, 0
    %141 = vmatprep.subr.bf16.mxu0 0
    %142 = vmatpush1.bf16.msra.mxu0 0
    %143 = vmatprep.subr.bf16.mxu0 0
    %144 = vmatpush1.bf16.msra.mxu0 0
    %145 = vmatprep.subr.bf16.mxu0 0
    %146 = vmatpush1.bf16.msra.mxu0 0
    %147 = vmatprep.subr.bf16.mxu0 0
    %148 = vmatpush1.bf16.msra.mxu0 0
    %149 = vmatprep.subr.bf16.mxu0 0
    %150 = vmatpush1.bf16.msra.mxu0 %v132
    %151 = vmatprep.subr.bf16.mxu0 0
    %152 = vmatpush1.bf16.msra.mxu0 %v131
    %153 = vmatprep.subr.bf16.mxu0 0
    %154 = vmatpush1.bf16.msra.mxu0 %v130
    %155 = vmatprep.subr.bf16.mxu0 0
    %156 = vmatpush1.bf16.msra.mxu0 %v129
    %157 = vmatprep.subr.bf16.mxu0 0
    %158 = vmatpush2.bf16.msra.mxu0 0
    %159 = vmatprep.subr.bf16.mxu0 0
    %160 = vmatpush2.bf16.msra.mxu0 0
    %161 = vmatprep.subr.bf16.mxu0 0
    %162 = vmatpush2.bf16.msra.mxu0 0
    %163 = vmatprep.subr.bf16.mxu0 0
    %164 = vmatpush2.bf16.msra.mxu0 0
    %165 = vmatprep.subr.bf16.mxu0 0
    %166 = vmatpush2.bf16.msra.mxu0 0
    %167 = vmatprep.subr.bf16.mxu0 0
    %168 = vmatpush2.bf16.msra.mxu0 0
    %169 = vmatprep.subr.bf16.mxu0 0
    %170 = vmatpush2.bf16.msra.mxu0 0
    %171 = vmatprep.subr.bf16.mxu0 0
    %172 = vmatpush2.bf16.msra.mxu0 0
    %173 = vmatprep.mubr.bf16.mxu0 0
    %174 = vmatmul.mubr.bf16.gmra.mxu0 %v139
    %v175 = vpop.f32.mrf.mxu0
    %v176 = vadd.f32 %v111, %v175
    %v177 = vpop.f32.mrf.mxu0
    %v178 = vpop.f32.mrf.mxu0
    %v179 = vpop.f32.mrf.mxu0
    %180 = vdwg.mxu0
    %v181 = vpack.c.bf16 %v176, %v176
    %v182 = vld [vmem:[%s5] sm:$0xf]
    %v183 = vld [vmem:[%s5 + $0x4] sm:$0xf]
    %v184 = vld [vmem:[%s5 + $0x8] sm:$0xf]
    %v185 = vld [vmem:[%s5 + $0xc] sm:$0xf]
    %v186 = vld [vmem:[%s5 + $0x10] sm:$0xf]
    %v187 = vld [vmem:[%s5 + $0x14] sm:$0xf]
    %v188 = vld [vmem:[%s5 + $0x18] sm:$0xf]
    %v189 = vld [vmem:[%s5 + $0x1c] sm:$0xf]
    %v190 = vld [vmem:[%s6] sm:$0x1]
    %v192 = vlaneseq
    %v193 = vshrl.u32 %v192, 7
    %v194 = vsub.s32 0, %v193
    %v195 = vrot.slane %v190, %v194
    %v205 = vunpack.c.l.b16 %v182
    %v206 = vunpack.c.l.b16 %v183
    %v207 = vunpack.c.l.b16 %v184
    %v208 = vunpack.c.l.b16 %v185
    %v209 = vunpack.c.l.b16 %v186
    %v210 = vunpack.c.l.b16 %v187
    %v211 = vunpack.c.l.b16 %v188
    %v212 = vunpack.c.l.b16 %v189
    %v213 = vpack.c.b16 %v206, %v205
    %v214 = vpack.c.b16 %v208, %v207
    %v215 = vpack.c.b16 %v210, %v209
    %v216 = vpack.c.b16 %v212, %v211
    %v222 = vsel %vm137, %v181, 0
    %224 = vmatprep.subr.bf16.mxu0 0
    %225 = vmatpush1.bf16.msra.mxu0 0
    %226 = vmatprep.subr.bf16.mxu0 0
    %227 = vmatpush1.bf16.msra.mxu0 0
    %228 = vmatprep.subr.bf16.mxu0 0
    %229 = vmatpush1.bf16.msra.mxu0 0
    %230 = vmatprep.subr.bf16.mxu0 0
    %231 = vmatpush1.bf16.msra.mxu0 0
    %232 = vmatprep.subr.bf16.mxu0 0
    %233 = vmatpush1.bf16.msra.mxu0 %v216
    %234 = vmatprep.subr.bf16.mxu0 0
    %235 = vmatpush1.bf16.msra.mxu0 %v215
    %236 = vmatprep.subr.bf16.mxu0 0
    %237 = vmatpush1.bf16.msra.mxu0 %v214
    %238 = vmatprep.subr.bf16.mxu0 0
    %239 = vmatpush1.bf16.msra.mxu0 %v213
    %240 = vmatprep.subr.bf16.mxu0 0
    %241 = vmatpush2.bf16.msra.mxu0 0
    %242 = vmatprep.subr.bf16.mxu0 0
    %243 = vmatpush2.bf16.msra.mxu0 0
    %244 = vmatprep.subr.bf16.mxu0 0
    %245 = vmatpush2.bf16.msra.mxu0 0
    %246 = vmatprep.subr.bf16.mxu0 0
    %247 = vmatpush2.bf16.msra.mxu0 0
    %248 = vmatprep.subr.bf16.mxu0 0
    %249 = vmatpush2.bf16.msra.mxu0 0
    %250 = vmatprep.subr.bf16.mxu0 0
    %251 = vmatpush2.bf16.msra.mxu0 0
    %252 = vmatprep.subr.bf16.mxu0 0
    %253 = vmatpush2.bf16.msra.mxu0 0
    %254 = vmatprep.subr.bf16.mxu0 0
    %255 = vmatpush2.bf16.msra.mxu0 0
    %256 = vmatprep.mubr.bf16.mxu0 0
    %257 = vmatmul.mubr.bf16.gmra.mxu0 %v222
    %v258 = vpop.f32.mrf.mxu0
    %v259 = vadd.f32 %v195, %v258
    %v260 = vpop.f32.mrf.mxu0
    %v261 = vpop.f32.mrf.mxu0
    %v262 = vpop.f32.mrf.mxu0
    %263 = vdwg.mxu0
    %264 = vst [vmem:[#allocation2] sm:$0xff] %v259
    // Predicated region
    $region30: #{mlp_forward.1} parent=1 // pred_check
      _
    $region31: #{mlp_forward.1} parent=1 // pred_check_branch
      %266 = sbr.rel (0) target = $region33
    $region32: #{mlp_forward.1} parent=1 // pred_region
      %s268 = ssub.s32 128, 128
      %269 = vsyncadd [#allocation3], %s268
      %s271 = sshll.u32 [#allocation2], 4
      %s272 = int_to_ptr.vmem [resolvable:$true] %s271
      %274 = dma.vmem_to_hbm [thread:$0]  %s272, 128, %s7, [#allocation3]
    $region33: #{mlp_forward.1} parent=1 // pred_fallthru
      _
    // Predicated region
    $region34: #{mlp_forward.1} parent=1 // pred_check
      _
    $region35: #{mlp_forward.1} parent=1 // pred_check_branch
      %276 = sbr.rel (0) target = $region37
    $region36: #{mlp_forward.1} parent=1 // pred_region
      %277 = dma.done [#allocation3], 128
    $region37: #{mlp_forward.1} parent=1 // pred_fallthru
      _
    %278 = vsyncpa [#allocation3], 1

</llo_original>
